<compile_context>
chip_gen: v7x
topology: tpu7x:2x2x1
jax: 0.10.0
libtpu: 0.0.40
codegen_flags: <defaults>
</compile_context>

<pallas_src>
import jax
import jax.numpy as jnp
from jax.experimental import pallas as pl
from jax.experimental.pallas import tpu as pltpu


def _linear_kernel(x_ref, w_ref, b_ref, o_ref):
    # x_ref: (TB, IN) VMEM tile of the batch
    # w_ref: (1, IN)  VMEM, resident across the whole grid
    # b_ref: (1,)     SMEM scalar bias
    # o_ref: (TB, 1)  VMEM output tile
    x = x_ref[...].astype(jnp.float32)
    w = w_ref[...].astype(jnp.float32)            # (1, IN) -> sublane broadcast
    # VPU elementwise multiply + XLU lane reduction; the MXU stays idle.
    # (A (TB,10)x(10,1) matmul would light up 1 of 128/256 MXU output columns
    # and pay fill/drain latency every grid step for ~10 MACs per row.)
    acc = jnp.sum(x * w, axis=-1, keepdims=True)  # (TB, 1), f32 accumulate
    o_ref[...] = (acc + b_ref[0]).astype(o_ref.dtype)
    # TODO(synk): a lane-dense (TB//128, 128) output slab would avoid the thin
    # (TB, 1) writeback, but needs a sublane->lane relayout (reshape of the
    # reduction result) that is not guaranteed to lower on every TPU generation;
    # the (.., 1) keepdims store below is the fully precedented, safe form.


def dummy_model_forward(x, text_lengths, weight, bias, *, block_rows=1024):
    """Pallas implementation of DummyModel.forward (y = x @ W.T + b).

    x:            (B, 10) float32
    text_lengths: unused (mirrors the PyTorch signature)
    weight:       (1, 10) float32
    bias:         (1,)    float32
    returns:      (B, 1)  float32
    """
    del text_lengths  # unused, exactly like the PyTorch module
    B, IN = x.shape
    OUT = weight.shape[0]
    assert weight.shape == (OUT, IN) and bias.shape == (OUT,) and OUT == 1
    assert block_rows % 8 == 0

    # Tiny batches: per-grid-step (~0.35 us) + custom-call entry/exit dominate;
    # let XLA emit the fused matmul+bias instead.
    if B < block_rows:
        return x @ weight.T + bias

    # block_rows=1024 keeps double-buffered VMEM at ~2 MiB total — far under
    # v7x's 64 MiB physical VMEM (and the 16/32 MiB scoped defaults) — while
    # being big enough to sit near the measured HBM roofline for this
    # memory-bound op.
    nt = pl.cdiv(B, block_rows)
    b_pad = nt * block_rows
    x_p = jnp.pad(x, ((0, b_pad - B), (0, 0))) if b_pad != B else x

    out = pl.pallas_call(
        _linear_kernel,
        out_shape=jax.ShapeDtypeStruct((b_pad, OUT), x.dtype),
        grid_spec=pltpu.PrefetchScalarGridSpec(
            num_scalar_prefetch=0,
            grid=(nt,),
            in_specs=[
                # Batch tile marches down the rows; IN == full array dim, so the
                # (8, 128) tiling rule is satisfied on the minor axis.
                pl.BlockSpec((block_rows, IN), lambda i: (i, 0)),
                # Weight row stays resident (same block index every step).
                pl.BlockSpec((1, IN), lambda i: (0, 0)),
                # Scalar bias lives in SMEM: no padded VMEM tile, no vector load.
                pl.BlockSpec(memory_space=pltpu.MemorySpace.SMEM),
            ],
            out_specs=pl.BlockSpec((block_rows, OUT), lambda i: (i, 0)),
        ),
        compiler_params=pltpu.CompilerParams(
            # Batch tiles are independent -> v7x's two TensorCores split the
            # grid; neutral on single-TC v5e/v6e.
            dimension_semantics=("parallel",),
        ),
    )(x_p, weight, bias)

    return out[:B]


if __name__ == "__main__":
    key = jax.random.PRNGKey(0)
    k_x, k_w, k_b, k_x2 = jax.random.split(key, 4)

    IN, OUT = 10, 1

    # Deterministic parameter init (mimics nn.Linear's uniform(-1/sqrt(IN), 1/sqrt(IN))).
    bound = 1.0 / jnp.sqrt(jnp.float32(IN))
    weight = jax.random.uniform(k_w, (OUT, IN), jnp.float32, -bound, bound)
    bias = jax.random.uniform(k_b, (OUT,), jnp.float32, -bound, bound)

    # Batch large enough to exercise the tiled Pallas path, and deliberately not
    # a multiple of the 1024-row tile so the zero-padded tail tile is covered too.
    B = 2500
    x = jax.random.normal(k_x, (B, IN), jnp.float32)
    text_lengths = jnp.full((B,), IN, dtype=jnp.int32)  # unused by forward

    y = dummy_model_forward(x, text_lengths, weight, bias)
    y = jax.block_until_ready(y)

    y_ref = x @ weight.T + bias
    assert y.shape == (B, OUT)
    assert jnp.allclose(y, y_ref, atol=1e-5, rtol=1e-5)

    # Tiny batch takes the fused-XLA fallback path (Pallas is pure overhead there).
    B2 = 8
    x2 = jax.random.normal(k_x2, (B2, IN), jnp.float32)
    y2 = dummy_model_forward(x2, jnp.full((B2,), IN, jnp.int32), weight, bias)
    y2 = jax.block_until_ready(y2)
    assert y2.shape == (B2, OUT)
    assert jnp.allclose(y2, x2 @ weight.T + bias, atol=1e-5, rtol=1e-5)

    print("KERNEL_OK")
</pallas_src>

<mosaic_0001>
module attributes {stable_mosaic.version = 11 : i64} {
  func.func @_linear_kernel(%arg0: i32, %arg1: memref<1024x10xf32, #tpu.memory_space<vmem>>, %arg2: memref<1x10xf32, #tpu.memory_space<vmem>>, %arg3: memref<1xf32, #tpu.memory_space<smem>>, %arg4: memref<1024x1xf32, #tpu.memory_space<vmem>>) attributes {dimension_semantics = [#tpu.dimension_semantics<parallel>], iteration_bounds = array<i64: 3>, scalar_prefetch = 0 : i64, scratch_operands = 0 : i64, tpu.core_type = #tpu.core_type<tc>, window_params = [{transform_indices = @transform_0, window_bounds = array<i64: 1024, 10>}, {pipeline_mode = #tpu.pipeline_mode<synchronous>, transform_indices = @transform_1, window_bounds = array<i64: 1, 10>}, {transform_indices = @transform_2, window_bounds = array<i64: 1>}, {transform_indices = @transform_3, window_bounds = array<i64: 1024, 1>}]} {
    %c0 = arith.constant 0 : index
    %c0_0 = arith.constant 0 : index
    %0 = vector.load %arg1[%c0, %c0_0] : memref<1024x10xf32, #tpu.memory_space<vmem>>, vector<1024x10xf32>
    %c0_1 = arith.constant 0 : index
    %c0_2 = arith.constant 0 : index
    %1 = vector.load %arg2[%c0_1, %c0_2] : memref<1x10xf32, #tpu.memory_space<vmem>>, vector<1x10xf32>
    %2 = vector.broadcast %1 : vector<1x10xf32> to vector<1024x10xf32>
    %3 = arith.mulf %0, %2 : vector<1024x10xf32>
    %cst = arith.constant dense<0.000000e+00> : vector<1024xf32>
    %4 = vector.multi_reduction <add>, %3, %cst [1] : vector<1024x10xf32> to vector<1024xf32>
    %5 = vector.shape_cast %4 : vector<1024xf32> to vector<1024x1xf32>
    %c0_3 = arith.constant 0 : index
    %6 = memref.load %arg3[%c0_3] : memref<1xf32, #tpu.memory_space<smem>>
    %7 = vector.broadcast %6 : f32 to vector<1024x1xf32>
    %8 = arith.addf %5, %7 : vector<1024x1xf32>
    %c0_4 = arith.constant 0 : index
    %c0_5 = arith.constant 0 : index
    %9 = vector.load %arg4[%c0_4, %c0_5] : memref<1024x1xf32, #tpu.memory_space<vmem>>, vector<1024x1xf32>
    tpu.vector_store %arg4[%c0_4, %c0_5], %8 {strides = array<i32>} : memref<1024x1xf32, #tpu.memory_space<vmem>>, vector<1024x1xf32>,
    return
  }
  func.func @transform_0(%arg0: i32) -> (i32, i32) {
    %c0_i32 = arith.constant 0 : i32
    %c0_i32_0 = arith.constant 0 : i32
    return %arg0, %c0_i32 : i32, i32
  }
  func.func @transform_1(%arg0: i32) -> (i32, i32) {
    %c0_i32 = arith.constant 0 : i32
    %c0_i32_0 = arith.constant 0 : i32
    %c0_i32_1 = arith.constant 0 : i32
    return %c0_i32, %c0_i32_0 : i32, i32
  }
  func.func @transform_2(%arg0: i32) -> i32 {
    %c0_i32 = arith.constant 0 : i32
    %c0_i32_0 = arith.constant 0 : i32
    return %c0_i32 : i32
  }
  func.func @transform_3(%arg0: i32) -> (i32, i32) {
    %c0_i32 = arith.constant 0 : i32
    %c0_i32_0 = arith.constant 0 : i32
    return %arg0, %c0_i32 : i32, i32
  }
}

</mosaic_0001>

<llo_original>
// kernel: tpu_custom_call.1
$region0: #{tpu_custom_call.1}
  #allocation0 [shape = 'u32[]', space=smem, size = 0x4, offset = 0x4, fixed_abs, tag = 'smem constant byte address 0x4 - core index']
  #allocation1 [shape = 'u32[144,128]{1,0:T(1,128)}', space=vmem, size = 0x12000, scoped, tag = 'internal scratch']
  #allocation2 [shape = 'f32[1]{0:T(128)S(6)}', space=smem, size = 0x200, scoped, tag = 'scoped memory for tpu_custom_call.1']
  %s0 = inlined_call_operand.vmem [shape: f32[3072,10], index: 0, kind: input, shape index: {}]
  %s1 = inlined_call_operand.vmem [shape: f32[1,10], index: 1, kind: input, shape index: {}]
  %s2 = inlined_call_operand.<no memory space> [shape: f32[1], index: 2, kind: input, shape index: {}]
  %s3 = inlined_call_operand.vmem [shape: f32[3072,1], index: 3, kind: output, shape index: {}]
  %s4 = sld [smem:[#allocation0]]
  $region45: #{tpu_custom_call.1} parent=0
    _
  %s6 = ssub.s32 1, %s4
  %s7 = scalar_select 0, %s6, %s4
  %8 = sst [smem:[#allocation2]] %s2
  loop: start=0, step=1, limit=5
  $region2: #{tpu_custom_call.1} parent=0 // loop_pre_header
    _
  $region3: #{tpu_custom_call.1} parent=0 // loop_header
    %s10 = sphi 0, %s14
    %p11 = scmp.ge.s32.totalorder %s10, 5
    %s20 = sphi 0, %s22
    %s23 = sphi 0, %s20
    %s24 = sphi 0, %s23
    %s40 = sphi 0, %s24
    %s44 = sphi 0, %s44
    %s46 = sphi 0, %s44
    %s47 = sphi 0, %s46
    %s61 = sphi 0, %s47
    %s65 = sphi 0, %s65
    %s67 = sphi 0, %s65
    %s68 = sphi 0, %s67
    %s82 = sphi 0, %s68
    %s88 = sphi 0, %s90
    %s91 = sphi 0, %s88
    %s92 = sphi 0, %s91
    %s108 = sphi 0, %s92
  $region4: #{tpu_custom_call.1} parent=0 // loop_header_branch
    %13 = sbr.rel (%p11) target = $region8
  $region5: #{tpu_custom_call.1} parent=0 // loop_body
    %s15 = ssub.s32 %s10, 1
    %s16 = ssub.s32 %s10, 2
    %s17 = sadd.s32 %s10, 1
    %s18 = ssub.s32 %s10, %s17
    %p19 = scmp.eq.s32.totalorder %s18, 0
    %s21 = sadd.s32 %s20, 1
    %s22 = scalar_select %p19, %s20, %s21
    %p25 = pneg %p19
    %p26 = scmp.eq.s32.totalorder %s10, 2
    %p27 = por %p25, %p26
    %p28 = scmp.ne.s32.totalorder %s20, %s23
    %p29 = scmp.eq.s32.totalorder %s10, 0
    %p30 = por %p28, %p29
    %p31 = scmp.ne.s32.totalorder %s20, %s23
    %p32 = scmp.eq.s32.totalorder %s15, 2
    %p33 = por %p31, %p32
    %p34 = scmp.ne.s32.totalorder %s23, %s24
    %p35 = scmp.eq.s32.totalorder %s15, 0
    %p36 = por %p34, %p35
    %p37 = scmp.ne.s32.totalorder %s23, %s24
    %p38 = scmp.eq.s32.totalorder %s16, 2
    %p39 = por %p37, %p38
    %p41 = scmp.ne.s32.totalorder %s24, %s40
    %p42 = scmp.eq.s32.totalorder %s16, 0
    %p43 = por %p41, %p42
    %s45 = sadd.s32 %s44, 1
    %p48 = scmp.eq.s32.totalorder %s10, 2
    %p49 = scmp.ne.s32.totalorder %s44, %s46
    %p50 = scmp.eq.s32.totalorder %s10, 0
    %p51 = por %p49, %p50
    %p52 = scmp.ne.s32.totalorder %s44, %s46
    %p53 = scmp.eq.s32.totalorder %s15, 2
    %p54 = por %p52, %p53
    %p55 = scmp.ne.s32.totalorder %s46, %s47
    %p56 = scmp.eq.s32.totalorder %s15, 0
    %p57 = por %p55, %p56
    %p58 = scmp.ne.s32.totalorder %s46, %s47
    %p59 = scmp.eq.s32.totalorder %s16, 2
    %p60 = por %p58, %p59
    %p62 = scmp.ne.s32.totalorder %s47, %s61
    %p63 = scmp.eq.s32.totalorder %s16, 0
    %p64 = por %p62, %p63
    %s66 = sadd.s32 %s65, 1
    %p69 = scmp.eq.s32.totalorder %s10, 2
    %p70 = scmp.ne.s32.totalorder %s65, %s67
    %p71 = scmp.eq.s32.totalorder %s10, 0
    %p72 = por %p70, %p71
    %p73 = scmp.ne.s32.totalorder %s65, %s67
    %p74 = scmp.eq.s32.totalorder %s15, 2
    %p75 = por %p73, %p74
    %p76 = scmp.ne.s32.totalorder %s67, %s68
    %p77 = scmp.eq.s32.totalorder %s15, 0
    %p78 = por %p76, %p77
    %p79 = scmp.ne.s32.totalorder %s67, %s68
    %p80 = scmp.eq.s32.totalorder %s16, 2
    %p81 = por %p79, %p80
    %p83 = scmp.ne.s32.totalorder %s68, %s82
    %p84 = scmp.eq.s32.totalorder %s16, 0
    %p85 = por %p83, %p84
    %s86 = ssub.s32 %s10, %s17
    %p87 = scmp.eq.s32.totalorder %s86, 0
    %s89 = sadd.s32 %s88, 1
    %s90 = scalar_select %p87, %s88, %s89
    %p93 = pneg %p87
    %p94 = scmp.eq.s32.totalorder %s10, 2
    %p95 = por %p93, %p94
    %p96 = scmp.ne.s32.totalorder %s88, %s91
    %p97 = scmp.eq.s32.totalorder %s10, 0
    %p98 = por %p96, %p97
    %p99 = scmp.ne.s32.totalorder %s88, %s91
    %p100 = scmp.eq.s32.totalorder %s15, 2
    %p101 = por %p99, %p100
    %p102 = scmp.ne.s32.totalorder %s91, %s92
    %p103 = scmp.eq.s32.totalorder %s15, 0
    %p104 = por %p102, %p103
    %p105 = scmp.ne.s32.totalorder %s91, %s92
    %p106 = scmp.eq.s32.totalorder %s16, 2
    %p107 = por %p105, %p106
    %p109 = scmp.ne.s32.totalorder %s92, %s108
    %p110 = scmp.eq.s32.totalorder %s16, 0
    %p111 = por %p109, %p110
    %p112 = scmp.le.s32.totalorder 1, %s10
    %p113 = scmp.lt.s32.totalorder %s10, 4
    %p114 = pnand %p112, %p113
    %p115 = pneg %p114
    // Predicated region
    $region9: #{tpu_custom_call.1} parent=5 // pred_check
      _
    $region10: #{tpu_custom_call.1} parent=5 // pred_check_branch
      %117 = sbr.rel (%p114) target = $region12
    $region11: #{tpu_custom_call.1} parent=5 // pred_region
      %s118 = ssub.s32 %s10, 1
      // Predicated region
      $region13: #{tpu_custom_call.1} parent=11 // pred_check
        %p119 = pneg %p57
      $region14: #{tpu_custom_call.1} parent=11 // pred_check_branch
        %121 = sbr.rel (%p119) target = $region16
      $region15: #{tpu_custom_call.1} parent=11 // pred_region
        _
      $region16: #{tpu_custom_call.1} parent=11 // pred_fallthru
        _
      // Predicated region
      $region17: #{tpu_custom_call.1} parent=11 // pred_check
        %p122 = pneg %p78
      $region18: #{tpu_custom_call.1} parent=11 // pred_check_branch
        %124 = sbr.rel (%p122) target = $region20
      $region19: #{tpu_custom_call.1} parent=11 // pred_region
        _
      $region20: #{tpu_custom_call.1} parent=11 // pred_fallthru
        _
    $region12: #{tpu_custom_call.1} parent=5 // pred_fallthru
      _
    %p125 = scmp.lt.s32.totalorder %s10, 3
    // Predicated region
    $region21: #{tpu_custom_call.1} parent=5 // pred_check
      %p126 = pneg %p125
    $region22: #{tpu_custom_call.1} parent=5 // pred_check_branch
      %128 = sbr.rel (%p126) target = $region24
    $region23: #{tpu_custom_call.1} parent=5 // pred_region
      // Predicated region
      $region25: #{tpu_custom_call.1} parent=23 // pred_check
        %p129 = pneg %p30
      $region26: #{tpu_custom_call.1} parent=23 // pred_check_branch
        %131 = sbr.rel (%p129) target = $region28
      $region27: #{tpu_custom_call.1} parent=23 // pred_region
        %s132 = smul.u32 128, %s10
        %p133 = scmp.lt.s32.totalorder %s132, 383
        %s134 = scalar_select %p133, %s132, 383
        %s135 = smul.addr %s134, 8
        %s136 = scalar_lea.vmem %s0, %s135
        %s137 = smul.u32 128, %s10
      $region28: #{tpu_custom_call.1} parent=23 // pred_fallthru
        _
    $region24: #{tpu_custom_call.1} parent=5 // pred_fallthru
      _
    %p138 = scmp.le.s32.totalorder 1, %s10
    %p139 = scmp.lt.s32.totalorder %s10, 4
    %p140 = pnand %p138, %p139
    %p141 = pneg %p140
    // Predicated region
    $region29: #{tpu_custom_call.1} parent=5 // pred_check
      _
    $region30: #{tpu_custom_call.1} parent=5 // pred_check_branch
      %143 = sbr.rel (%p140) target = $region32
    $region31: #{tpu_custom_call.1} parent=5 // pred_region
      %s144 = ssub.s32 %s10, 1
      %s145 = smul.u32 128, %s15
      %p146 = scmp.lt.s32.totalorder %s145, 383
      %s147 = scalar_select %p146, %s145, 383
      %s148 = smul.addr %s147, 8
      %s149 = scalar_lea.vmem %s0, %s148
      %p150 = pneg %p36
      %p151 = pneg %p33
      %p152 = pneg %p57
      %p153 = pneg %p54
      %p154 = pneg %p78
      %p155 = pneg %p75
      %p156 = pneg %p104
      %p157 = pneg %p101
      %s158 = smul.u32 128, %s15
      %p159 = scmp.lt.s32.totalorder %s158, 383
      %s160 = scalar_select %p159, %s158, 383
      %s161 = smul.addr %s160, 8
      %s162 = scalar_lea.vmem %s3, %s161
      %s163 = smul.u32 128, %s15
      %p164 = scmp.lt.s32.totalorder %s163, 383
      %s165 = scalar_select %p164, %s163, 383
      %s166 = smul.addr %s165, 8
      %s167 = scalar_lea.vmem %s0, %s166
      %s168 = smul.u32 128, %s15
      %s169 = smul.u32 128, %s15
      %p170 = scmp.lt.s32.totalorder %s169, 383
      %s171 = scalar_select %p170, %s169, 383
      %s172 = smul.addr %s171, 8
      %s173 = scalar_lea.vmem %s3, %s172
      %s174 = smul.u32 128, %s15
      %v175 = vld [vmem:[%s167] sm:$0xff]
      %v176 = vld [vmem:[%s167 + $0x8] sm:$0xff]
      %v177 = vld [vmem:[%s167 + $0x10] sm:$0xff]
      %v178 = vld [vmem:[%s167 + $0x18] sm:$0xff]
      %v179 = vld [vmem:[%s167 + $0x20] sm:$0xff]
      %v180 = vld [vmem:[%s167 + $0x28] sm:$0xff]
      %v181 = vld [vmem:[%s167 + $0x30] sm:$0xff]
      %v182 = vld [vmem:[%s167 + $0x38] sm:$0xff]
      %v183 = vld [vmem:[%s167 + $0x40] sm:$0xff]
      %v184 = vld [vmem:[%s167 + $0x48] sm:$0xff]
      %v185 = vld [vmem:[%s167 + $0x50] sm:$0xff]
      %v186 = vld [vmem:[%s167 + $0x58] sm:$0xff]
      %v187 = vld [vmem:[%s167 + $0x60] sm:$0xff]
      %v188 = vld [vmem:[%s167 + $0x68] sm:$0xff]
      %v189 = vld [vmem:[%s167 + $0x70] sm:$0xff]
      %v190 = vld [vmem:[%s167 + $0x78] sm:$0xff]
      %v191 = vld [vmem:[%s167 + $0x80] sm:$0xff]
      %v192 = vld [vmem:[%s167 + $0x88] sm:$0xff]
      %v193 = vld [vmem:[%s167 + $0x90] sm:$0xff]
      %v194 = vld [vmem:[%s167 + $0x98] sm:$0xff]
      %v195 = vld [vmem:[%s167 + $0xa0] sm:$0xff]
      %v196 = vld [vmem:[%s167 + $0xa8] sm:$0xff]
      %v197 = vld [vmem:[%s167 + $0xb0] sm:$0xff]
      %v198 = vld [vmem:[%s167 + $0xb8] sm:$0xff]
      %v199 = vld [vmem:[%s167 + $0xc0] sm:$0xff]
      %v200 = vld [vmem:[%s167 + $0xc8] sm:$0xff]
      %v201 = vld [vmem:[%s167 + $0xd0] sm:$0xff]
      %v202 = vld [vmem:[%s167 + $0xd8] sm:$0xff]
      %v203 = vld [vmem:[%s167 + $0xe0] sm:$0xff]
      %v204 = vld [vmem:[%s167 + $0xe8] sm:$0xff]
      %v205 = vld [vmem:[%s167 + $0xf0] sm:$0xff]
      %v206 = vld [vmem:[%s167 + $0xf8] sm:$0xff]
      %v207 = vld [vmem:[%s167 + $0x100] sm:$0xff]
      %v208 = vld [vmem:[%s167 + $0x108] sm:$0xff]
      %v209 = vld [vmem:[%s167 + $0x110] sm:$0xff]
      %v210 = vld [vmem:[%s167 + $0x118] sm:$0xff]
      %v211 = vld [vmem:[%s167 + $0x120] sm:$0xff]
      %v212 = vld [vmem:[%s167 + $0x128] sm:$0xff]
      %v213 = vld [vmem:[%s167 + $0x130] sm:$0xff]
      %v214 = vld [vmem:[%s167 + $0x138] sm:$0xff]
      %v215 = vld [vmem:[%s167 + $0x140] sm:$0xff]
      %v216 = vld [vmem:[%s167 + $0x148] sm:$0xff]
      %v217 = vld [vmem:[%s167 + $0x150] sm:$0xff]
      %v218 = vld [vmem:[%s167 + $0x158] sm:$0xff]
      %v219 = vld [vmem:[%s167 + $0x160] sm:$0xff]
      %v220 = vld [vmem:[%s167 + $0x168] sm:$0xff]
      %v221 = vld [vmem:[%s167 + $0x170] sm:$0xff]
      %v222 = vld [vmem:[%s167 + $0x178] sm:$0xff]
      %v223 = vld [vmem:[%s167 + $0x180] sm:$0xff]
      %v224 = vld [vmem:[%s167 + $0x188] sm:$0xff]
      %v225 = vld [vmem:[%s167 + $0x190] sm:$0xff]
      %v226 = vld [vmem:[%s167 + $0x198] sm:$0xff]
      %v227 = vld [vmem:[%s167 + $0x1a0] sm:$0xff]
      %v228 = vld [vmem:[%s167 + $0x1a8] sm:$0xff]
      %v229 = vld [vmem:[%s167 + $0x1b0] sm:$0xff]
      %v230 = vld [vmem:[%s167 + $0x1b8] sm:$0xff]
      %v231 = vld [vmem:[%s167 + $0x1c0] sm:$0xff]
      %v232 = vld [vmem:[%s167 + $0x1c8] sm:$0xff]
      %v233 = vld [vmem:[%s167 + $0x1d0] sm:$0xff]
      %v234 = vld [vmem:[%s167 + $0x1d8] sm:$0xff]
      %v235 = vld [vmem:[%s167 + $0x1e0] sm:$0xff]
      %v236 = vld [vmem:[%s167 + $0x1e8] sm:$0xff]
      %v237 = vld [vmem:[%s167 + $0x1f0] sm:$0xff]
      %v238 = vld [vmem:[%s167 + $0x1f8] sm:$0xff]
      %v239 = vld [vmem:[%s167 + $0x200] sm:$0xff]
      %v240 = vld [vmem:[%s167 + $0x208] sm:$0xff]
      %v241 = vld [vmem:[%s167 + $0x210] sm:$0xff]
      %v242 = vld [vmem:[%s167 + $0x218] sm:$0xff]
      %v243 = vld [vmem:[%s167 + $0x220] sm:$0xff]
      %v244 = vld [vmem:[%s167 + $0x228] sm:$0xff]
      %v245 = vld [vmem:[%s167 + $0x230] sm:$0xff]
      %v246 = vld [vmem:[%s167 + $0x238] sm:$0xff]
      %v247 = vld [vmem:[%s167 + $0x240] sm:$0xff]
      %v248 = vld [vmem:[%s167 + $0x248] sm:$0xff]
      %v249 = vld [vmem:[%s167 + $0x250] sm:$0xff]
      %v250 = vld [vmem:[%s167 + $0x258] sm:$0xff]
      %v251 = vld [vmem:[%s167 + $0x260] sm:$0xff]
      %v252 = vld [vmem:[%s167 + $0x268] sm:$0xff]
      %v253 = vld [vmem:[%s167 + $0x270] sm:$0xff]
      %v254 = vld [vmem:[%s167 + $0x278] sm:$0xff]
      %v255 = vld [vmem:[%s167 + $0x280] sm:$0xff]
      %v256 = vld [vmem:[%s167 + $0x288] sm:$0xff]
      %v257 = vld [vmem:[%s167 + $0x290] sm:$0xff]
      %v258 = vld [vmem:[%s167 + $0x298] sm:$0xff]
      %v259 = vld [vmem:[%s167 + $0x2a0] sm:$0xff]
      %v260 = vld [vmem:[%s167 + $0x2a8] sm:$0xff]
      %v261 = vld [vmem:[%s167 + $0x2b0] sm:$0xff]
      %v262 = vld [vmem:[%s167 + $0x2b8] sm:$0xff]
      %v263 = vld [vmem:[%s167 + $0x2c0] sm:$0xff]
      %v264 = vld [vmem:[%s167 + $0x2c8] sm:$0xff]
      %v265 = vld [vmem:[%s167 + $0x2d0] sm:$0xff]
      %v266 = vld [vmem:[%s167 + $0x2d8] sm:$0xff]
      %v267 = vld [vmem:[%s167 + $0x2e0] sm:$0xff]
      %v268 = vld [vmem:[%s167 + $0x2e8] sm:$0xff]
      %v269 = vld [vmem:[%s167 + $0x2f0] sm:$0xff]
      %v270 = vld [vmem:[%s167 + $0x2f8] sm:$0xff]
      %v271 = vld [vmem:[%s167 + $0x300] sm:$0xff]
      %v272 = vld [vmem:[%s167 + $0x308] sm:$0xff]
      %v273 = vld [vmem:[%s167 + $0x310] sm:$0xff]
      %v274 = vld [vmem:[%s167 + $0x318] sm:$0xff]
      %v275 = vld [vmem:[%s167 + $0x320] sm:$0xff]
      %v276 = vld [vmem:[%s167 + $0x328] sm:$0xff]
      %v277 = vld [vmem:[%s167 + $0x330] sm:$0xff]
      %v278 = vld [vmem:[%s167 + $0x338] sm:$0xff]
      %v279 = vld [vmem:[%s167 + $0x340] sm:$0xff]
      %v280 = vld [vmem:[%s167 + $0x348] sm:$0xff]
      %v281 = vld [vmem:[%s167 + $0x350] sm:$0xff]
      %v282 = vld [vmem:[%s167 + $0x358] sm:$0xff]
      %v283 = vld [vmem:[%s167 + $0x360] sm:$0xff]
      %v284 = vld [vmem:[%s167 + $0x368] sm:$0xff]
      %v285 = vld [vmem:[%s167 + $0x370] sm:$0xff]
      %v286 = vld [vmem:[%s167 + $0x378] sm:$0xff]
      %v287 = vld [vmem:[%s167 + $0x380] sm:$0xff]
      %v288 = vld [vmem:[%s167 + $0x388] sm:$0xff]
      %v289 = vld [vmem:[%s167 + $0x390] sm:$0xff]
      %v290 = vld [vmem:[%s167 + $0x398] sm:$0xff]
      %v291 = vld [vmem:[%s167 + $0x3a0] sm:$0xff]
      %v292 = vld [vmem:[%s167 + $0x3a8] sm:$0xff]
      %v293 = vld [vmem:[%s167 + $0x3b0] sm:$0xff]
      %v294 = vld [vmem:[%s167 + $0x3b8] sm:$0xff]
      %v295 = vld [vmem:[%s167 + $0x3c0] sm:$0xff]
      %v296 = vld [vmem:[%s167 + $0x3c8] sm:$0xff]
      %v297 = vld [vmem:[%s167 + $0x3d0] sm:$0xff]
      %v298 = vld [vmem:[%s167 + $0x3d8] sm:$0xff]
      %v299 = vld [vmem:[%s167 + $0x3e0] sm:$0xff]
      %v300 = vld [vmem:[%s167 + $0x3e8] sm:$0xff]
      %v301 = vld [vmem:[%s167 + $0x3f0] sm:$0xff]
      %v302 = vld [vmem:[%s167 + $0x3f8] sm:$0xff]
      %v303 = vld [vmem:[%s1] sm:$0x1]
      %v305 = vlaneseq
      %v306 = vshrl.u32 %v305, 7
      %v307 = vsub.s32 0, %v306
      %v308 = vrot.slane %v303, %v307
      %v310 = vmul.f32 %v175, %v308
      %v311 = vmul.f32 %v176, %v308
      %v312 = vmul.f32 %v177, %v308
      %v313 = vmul.f32 %v178, %v308
      %v314 = vmul.f32 %v179, %v308
      %v315 = vmul.f32 %v180, %v308
      %v316 = vmul.f32 %v181, %v308
      %v317 = vmul.f32 %v182, %v308
      %v318 = vmul.f32 %v183, %v308
      %v319 = vmul.f32 %v184, %v308
      %v320 = vmul.f32 %v185, %v308
      %v321 = vmul.f32 %v186, %v308
      %v322 = vmul.f32 %v187, %v308
      %v323 = vmul.f32 %v188, %v308
      %v324 = vmul.f32 %v189, %v308
      %v325 = vmul.f32 %v190, %v308
      %v326 = vmul.f32 %v191, %v308
      %v327 = vmul.f32 %v192, %v308
      %v328 = vmul.f32 %v193, %v308
      %v329 = vmul.f32 %v194, %v308
      %v330 = vmul.f32 %v195, %v308
      %v331 = vmul.f32 %v196, %v308
      %v332 = vmul.f32 %v197, %v308
      %v333 = vmul.f32 %v198, %v308
      %v334 = vmul.f32 %v199, %v308
      %v335 = vmul.f32 %v200, %v308
      %v336 = vmul.f32 %v201, %v308
      %v337 = vmul.f32 %v202, %v308
      %v338 = vmul.f32 %v203, %v308
      %v339 = vmul.f32 %v204, %v308
      %v340 = vmul.f32 %v205, %v308
      %v341 = vmul.f32 %v206, %v308
      %v342 = vmul.f32 %v207, %v308
      %v343 = vmul.f32 %v208, %v308
      %v344 = vmul.f32 %v209, %v308
      %v345 = vmul.f32 %v210, %v308
      %v346 = vmul.f32 %v211, %v308
      %v347 = vmul.f32 %v212, %v308
      %v348 = vmul.f32 %v213, %v308
      %v349 = vmul.f32 %v214, %v308
      %v350 = vmul.f32 %v215, %v308
      %v351 = vmul.f32 %v216, %v308
      %v352 = vmul.f32 %v217, %v308
      %v353 = vmul.f32 %v218, %v308
      %v354 = vmul.f32 %v219, %v308
      %v355 = vmul.f32 %v220, %v308
      %v356 = vmul.f32 %v221, %v308
      %v357 = vmul.f32 %v222, %v308
      %v358 = vmul.f32 %v223, %v308
      %v359 = vmul.f32 %v224, %v308
      %v360 = vmul.f32 %v225, %v308
      %v361 = vmul.f32 %v226, %v308
      %v362 = vmul.f32 %v227, %v308
      %v363 = vmul.f32 %v228, %v308
      %v364 = vmul.f32 %v229, %v308
      %v365 = vmul.f32 %v230, %v308
      %v366 = vmul.f32 %v231, %v308
      %v367 = vmul.f32 %v232, %v308
      %v368 = vmul.f32 %v233, %v308
      %v369 = vmul.f32 %v234, %v308
      %v370 = vmul.f32 %v235, %v308
      %v371 = vmul.f32 %v236, %v308
      %v372 = vmul.f32 %v237, %v308
      %v373 = vmul.f32 %v238, %v308
      %v374 = vmul.f32 %v239, %v308
      %v375 = vmul.f32 %v240, %v308
      %v376 = vmul.f32 %v241, %v308
      %v377 = vmul.f32 %v242, %v308
      %v378 = vmul.f32 %v243, %v308
      %v379 = vmul.f32 %v244, %v308
      %v380 = vmul.f32 %v245, %v308
      %v381 = vmul.f32 %v246, %v308
      %v382 = vmul.f32 %v247, %v308
      %v383 = vmul.f32 %v248, %v308
      %v384 = vmul.f32 %v249, %v308
      %v385 = vmul.f32 %v250, %v308
      %v386 = vmul.f32 %v251, %v308
      %v387 = vmul.f32 %v252, %v308
      %v388 = vmul.f32 %v253, %v308
      %v389 = vmul.f32 %v254, %v308
      %v390 = vmul.f32 %v255, %v308
      %v391 = vmul.f32 %v256, %v308
      %v392 = vmul.f32 %v257, %v308
      %v393 = vmul.f32 %v258, %v308
      %v394 = vmul.f32 %v259, %v308
      %v395 = vmul.f32 %v260, %v308
      %v396 = vmul.f32 %v261, %v308
      %v397 = vmul.f32 %v262, %v308
      %v398 = vmul.f32 %v263, %v308
      %v399 = vmul.f32 %v264, %v308
      %v400 = vmul.f32 %v265, %v308
      %v401 = vmul.f32 %v266, %v308
      %v402 = vmul.f32 %v267, %v308
      %v403 = vmul.f32 %v268, %v308
      %v404 = vmul.f32 %v269, %v308
      %v405 = vmul.f32 %v270, %v308
      %v406 = vmul.f32 %v271, %v308
      %v407 = vmul.f32 %v272, %v308
      %v408 = vmul.f32 %v273, %v308
      %v409 = vmul.f32 %v274, %v308
      %v410 = vmul.f32 %v275, %v308
      %v411 = vmul.f32 %v276, %v308
      %v412 = vmul.f32 %v277, %v308
      %v413 = vmul.f32 %v278, %v308
      %v414 = vmul.f32 %v279, %v308
      %v415 = vmul.f32 %v280, %v308
      %v416 = vmul.f32 %v281, %v308
      %v417 = vmul.f32 %v282, %v308
      %v418 = vmul.f32 %v283, %v308
      %v419 = vmul.f32 %v284, %v308
      %v420 = vmul.f32 %v285, %v308
      %v421 = vmul.f32 %v286, %v308
      %v422 = vmul.f32 %v287, %v308
      %v423 = vmul.f32 %v288, %v308
      %v424 = vmul.f32 %v289, %v308
      %v425 = vmul.f32 %v290, %v308
      %v426 = vmul.f32 %v291, %v308
      %v427 = vmul.f32 %v292, %v308
      %v428 = vmul.f32 %v293, %v308
      %v429 = vmul.f32 %v294, %v308
      %v430 = vmul.f32 %v295, %v308
      %v431 = vmul.f32 %v296, %v308
      %v432 = vmul.f32 %v297, %v308
      %v433 = vmul.f32 %v298, %v308
      %v434 = vmul.f32 %v299, %v308
      %v435 = vmul.f32 %v300, %v308
      %v436 = vmul.f32 %v301, %v308
      %v437 = vmul.f32 %v302, %v308
      %vm438 = vcmask 80896
      %v439 = vsel %vm438, %v310, 0.0
      %440 = vadd.xlane.f32.xlu0 %v439
      %v441 = vpop.xlane.xlu0 %440
      %v442 = vsel %vm438, %v311, 0.0
      %443 = vadd.xlane.f32.xlu0 %v442
      %v444 = vpop.xlane.xlu0 %443
      %v445 = vsel %vm438, %v312, 0.0
      %446 = vadd.xlane.f32.xlu0 %v445
      %v447 = vpop.xlane.xlu0 %446
      %v448 = vsel %vm438, %v313, 0.0
      %449 = vadd.xlane.f32.xlu0 %v448
      %v450 = vpop.xlane.xlu0 %449
      %v451 = vsel %vm438, %v314, 0.0
      %452 = vadd.xlane.f32.xlu0 %v451
      %v453 = vpop.xlane.xlu0 %452
      %v454 = vsel %vm438, %v315, 0.0
      %455 = vadd.xlane.f32.xlu0 %v454
      %v456 = vpop.xlane.xlu0 %455
      %v457 = vsel %vm438, %v316, 0.0
      %458 = vadd.xlane.f32.xlu0 %v457
      %v459 = vpop.xlane.xlu0 %458
      %v460 = vsel %vm438, %v317, 0.0
      %461 = vadd.xlane.f32.xlu0 %v460
      %v462 = vpop.xlane.xlu0 %461
      %v463 = vsel %vm438, %v318, 0.0
      %464 = vadd.xlane.f32.xlu0 %v463
      %v465 = vpop.xlane.xlu0 %464
      %v466 = vsel %vm438, %v319, 0.0
      %467 = vadd.xlane.f32.xlu0 %v466
      %v468 = vpop.xlane.xlu0 %467
      %v469 = vsel %vm438, %v320, 0.0
      %470 = vadd.xlane.f32.xlu0 %v469
      %v471 = vpop.xlane.xlu0 %470
      %v472 = vsel %vm438, %v321, 0.0
      %473 = vadd.xlane.f32.xlu0 %v472
      %v474 = vpop.xlane.xlu0 %473
      %v475 = vsel %vm438, %v322, 0.0
      %476 = vadd.xlane.f32.xlu0 %v475
      %v477 = vpop.xlane.xlu0 %476
      %v478 = vsel %vm438, %v323, 0.0
      %479 = vadd.xlane.f32.xlu0 %v478
      %v480 = vpop.xlane.xlu0 %479
      %v481 = vsel %vm438, %v324, 0.0
      %482 = vadd.xlane.f32.xlu0 %v481
      %v483 = vpop.xlane.xlu0 %482
      %v484 = vsel %vm438, %v325, 0.0
      %485 = vadd.xlane.f32.xlu0 %v484
      %v486 = vpop.xlane.xlu0 %485
      %v487 = vsel %vm438, %v326, 0.0
      %488 = vadd.xlane.f32.xlu0 %v487
      %v489 = vpop.xlane.xlu0 %488
      %v490 = vsel %vm438, %v327, 0.0
      %491 = vadd.xlane.f32.xlu0 %v490
      %v492 = vpop.xlane.xlu0 %491
      %v493 = vsel %vm438, %v328, 0.0
      %494 = vadd.xlane.f32.xlu0 %v493
      %v495 = vpop.xlane.xlu0 %494
      %v496 = vsel %vm438, %v329, 0.0
      %497 = vadd.xlane.f32.xlu0 %v496
      %v498 = vpop.xlane.xlu0 %497
      %v499 = vsel %vm438, %v330, 0.0
      %500 = vadd.xlane.f32.xlu0 %v499
      %v501 = vpop.xlane.xlu0 %500
      %v502 = vsel %vm438, %v331, 0.0
      %503 = vadd.xlane.f32.xlu0 %v502
      %v504 = vpop.xlane.xlu0 %503
      %v505 = vsel %vm438, %v332, 0.0
      %506 = vadd.xlane.f32.xlu0 %v505
      %v507 = vpop.xlane.xlu0 %506
      %v508 = vsel %vm438, %v333, 0.0
      %509 = vadd.xlane.f32.xlu0 %v508
      %v510 = vpop.xlane.xlu0 %509
      %v511 = vsel %vm438, %v334, 0.0
      %512 = vadd.xlane.f32.xlu0 %v511
      %v513 = vpop.xlane.xlu0 %512
      %v514 = vsel %vm438, %v335, 0.0
      %515 = vadd.xlane.f32.xlu0 %v514
      %v516 = vpop.xlane.xlu0 %515
      %v517 = vsel %vm438, %v336, 0.0
      %518 = vadd.xlane.f32.xlu0 %v517
      %v519 = vpop.xlane.xlu0 %518
      %v520 = vsel %vm438, %v337, 0.0
      %521 = vadd.xlane.f32.xlu0 %v520
      %v522 = vpop.xlane.xlu0 %521
      %v523 = vsel %vm438, %v338, 0.0
      %524 = vadd.xlane.f32.xlu0 %v523
      %v525 = vpop.xlane.xlu0 %524
      %v526 = vsel %vm438, %v339, 0.0
      %527 = vadd.xlane.f32.xlu0 %v526
      %v528 = vpop.xlane.xlu0 %527
      %v529 = vsel %vm438, %v340, 0.0
      %530 = vadd.xlane.f32.xlu0 %v529
      %v531 = vpop.xlane.xlu0 %530
      %v532 = vsel %vm438, %v341, 0.0
      %533 = vadd.xlane.f32.xlu0 %v532
      %v534 = vpop.xlane.xlu0 %533
      %v535 = vsel %vm438, %v342, 0.0
      %536 = vadd.xlane.f32.xlu0 %v535
      %v537 = vpop.xlane.xlu0 %536
      %v538 = vsel %vm438, %v343, 0.0
      %539 = vadd.xlane.f32.xlu0 %v538
      %v540 = vpop.xlane.xlu0 %539
      %v541 = vsel %vm438, %v344, 0.0
      %542 = vadd.xlane.f32.xlu0 %v541
      %v543 = vpop.xlane.xlu0 %542
      %v544 = vsel %vm438, %v345, 0.0
      %545 = vadd.xlane.f32.xlu0 %v544
      %v546 = vpop.xlane.xlu0 %545
      %v547 = vsel %vm438, %v346, 0.0
      %548 = vadd.xlane.f32.xlu0 %v547
      %v549 = vpop.xlane.xlu0 %548
      %v550 = vsel %vm438, %v347, 0.0
      %551 = vadd.xlane.f32.xlu0 %v550
      %v552 = vpop.xlane.xlu0 %551
      %v553 = vsel %vm438, %v348, 0.0
      %554 = vadd.xlane.f32.xlu0 %v553
      %v555 = vpop.xlane.xlu0 %554
      %v556 = vsel %vm438, %v349, 0.0
      %557 = vadd.xlane.f32.xlu0 %v556
      %v558 = vpop.xlane.xlu0 %557
      %v559 = vsel %vm438, %v350, 0.0
      %560 = vadd.xlane.f32.xlu0 %v559
      %v561 = vpop.xlane.xlu0 %560
      %v562 = vsel %vm438, %v351, 0.0
      %563 = vadd.xlane.f32.xlu0 %v562
      %v564 = vpop.xlane.xlu0 %563
      %v565 = vsel %vm438, %v352, 0.0
      %566 = vadd.xlane.f32.xlu0 %v565
      %v567 = vpop.xlane.xlu0 %566
      %v568 = vsel %vm438, %v353, 0.0
      %569 = vadd.xlane.f32.xlu0 %v568
      %v570 = vpop.xlane.xlu0 %569
      %v571 = vsel %vm438, %v354, 0.0
      %572 = vadd.xlane.f32.xlu0 %v571
      %v573 = vpop.xlane.xlu0 %572
      %v574 = vsel %vm438, %v355, 0.0
      %575 = vadd.xlane.f32.xlu0 %v574
      %v576 = vpop.xlane.xlu0 %575
      %v577 = vsel %vm438, %v356, 0.0
      %578 = vadd.xlane.f32.xlu0 %v577
      %v579 = vpop.xlane.xlu0 %578
      %v580 = vsel %vm438, %v357, 0.0
      %581 = vadd.xlane.f32.xlu0 %v580
      %v582 = vpop.xlane.xlu0 %581
      %v583 = vsel %vm438, %v358, 0.0
      %584 = vadd.xlane.f32.xlu0 %v583
      %v585 = vpop.xlane.xlu0 %584
      %v586 = vsel %vm438, %v359, 0.0
      %587 = vadd.xlane.f32.xlu0 %v586
      %v588 = vpop.xlane.xlu0 %587
      %v589 = vsel %vm438, %v360, 0.0
      %590 = vadd.xlane.f32.xlu0 %v589
      %v591 = vpop.xlane.xlu0 %590
      %v592 = vsel %vm438, %v361, 0.0
      %593 = vadd.xlane.f32.xlu0 %v592
      %v594 = vpop.xlane.xlu0 %593
      %v595 = vsel %vm438, %v362, 0.0
      %596 = vadd.xlane.f32.xlu0 %v595
      %v597 = vpop.xlane.xlu0 %596
      %v598 = vsel %vm438, %v363, 0.0
      %599 = vadd.xlane.f32.xlu0 %v598
      %v600 = vpop.xlane.xlu0 %599
      %v601 = vsel %vm438, %v364, 0.0
      %602 = vadd.xlane.f32.xlu0 %v601
      %v603 = vpop.xlane.xlu0 %602
      %v604 = vsel %vm438, %v365, 0.0
      %605 = vadd.xlane.f32.xlu0 %v604
      %v606 = vpop.xlane.xlu0 %605
      %v607 = vsel %vm438, %v366, 0.0
      %608 = vadd.xlane.f32.xlu0 %v607
      %v609 = vpop.xlane.xlu0 %608
      %v610 = vsel %vm438, %v367, 0.0
      %611 = vadd.xlane.f32.xlu0 %v610
      %v612 = vpop.xlane.xlu0 %611
      %v613 = vsel %vm438, %v368, 0.0
      %614 = vadd.xlane.f32.xlu0 %v613
      %v615 = vpop.xlane.xlu0 %614
      %v616 = vsel %vm438, %v369, 0.0
      %617 = vadd.xlane.f32.xlu0 %v616
      %v618 = vpop.xlane.xlu0 %617
      %v619 = vsel %vm438, %v370, 0.0
      %620 = vadd.xlane.f32.xlu0 %v619
      %v621 = vpop.xlane.xlu0 %620
      %v622 = vsel %vm438, %v371, 0.0
      %623 = vadd.xlane.f32.xlu0 %v622
      %v624 = vpop.xlane.xlu0 %623
      %v625 = vsel %vm438, %v372, 0.0
      %626 = vadd.xlane.f32.xlu0 %v625
      %v627 = vpop.xlane.xlu0 %626
      %v628 = vsel %vm438, %v373, 0.0
      %629 = vadd.xlane.f32.xlu0 %v628
      %v630 = vpop.xlane.xlu0 %629
      %v631 = vsel %vm438, %v374, 0.0
      %632 = vadd.xlane.f32.xlu0 %v631
      %v633 = vpop.xlane.xlu0 %632
      %v634 = vsel %vm438, %v375, 0.0
      %635 = vadd.xlane.f32.xlu0 %v634
      %v636 = vpop.xlane.xlu0 %635
      %v637 = vsel %vm438, %v376, 0.0
      %638 = vadd.xlane.f32.xlu0 %v637
      %v639 = vpop.xlane.xlu0 %638
      %v640 = vsel %vm438, %v377, 0.0
      %641 = vadd.xlane.f32.xlu0 %v640
      %v642 = vpop.xlane.xlu0 %641
      %v643 = vsel %vm438, %v378, 0.0
      %644 = vadd.xlane.f32.xlu0 %v643
      %v645 = vpop.xlane.xlu0 %644
      %v646 = vsel %vm438, %v379, 0.0
      %647 = vadd.xlane.f32.xlu0 %v646
      %v648 = vpop.xlane.xlu0 %647
      %v649 = vsel %vm438, %v380, 0.0
      %650 = vadd.xlane.f32.xlu0 %v649
      %v651 = vpop.xlane.xlu0 %650
      %v652 = vsel %vm438, %v381, 0.0
      %653 = vadd.xlane.f32.xlu0 %v652
      %v654 = vpop.xlane.xlu0 %653
      %v655 = vsel %vm438, %v382, 0.0
      %656 = vadd.xlane.f32.xlu0 %v655
      %v657 = vpop.xlane.xlu0 %656
      %v658 = vsel %vm438, %v383, 0.0
      %659 = vadd.xlane.f32.xlu0 %v658
      %v660 = vpop.xlane.xlu0 %659
      %v661 = vsel %vm438, %v384, 0.0
      %662 = vadd.xlane.f32.xlu0 %v661
      %v663 = vpop.xlane.xlu0 %662
      %v664 = vsel %vm438, %v385, 0.0
      %665 = vadd.xlane.f32.xlu0 %v664
      %v666 = vpop.xlane.xlu0 %665
      %v667 = vsel %vm438, %v386, 0.0
      %668 = vadd.xlane.f32.xlu0 %v667
      %v669 = vpop.xlane.xlu0 %668
      %v670 = vsel %vm438, %v387, 0.0
      %671 = vadd.xlane.f32.xlu0 %v670
      %v672 = vpop.xlane.xlu0 %671
      %v673 = vsel %vm438, %v388, 0.0
      %674 = vadd.xlane.f32.xlu0 %v673
      %v675 = vpop.xlane.xlu0 %674
      %v676 = vsel %vm438, %v389, 0.0
      %677 = vadd.xlane.f32.xlu0 %v676
      %v678 = vpop.xlane.xlu0 %677
      %v679 = vsel %vm438, %v390, 0.0
      %680 = vadd.xlane.f32.xlu0 %v679
      %v681 = vpop.xlane.xlu0 %680
      %v682 = vsel %vm438, %v391, 0.0
      %683 = vadd.xlane.f32.xlu0 %v682
      %v684 = vpop.xlane.xlu0 %683
      %v685 = vsel %vm438, %v392, 0.0
      %686 = vadd.xlane.f32.xlu0 %v685
      %v687 = vpop.xlane.xlu0 %686
      %v688 = vsel %vm438, %v393, 0.0
      %689 = vadd.xlane.f32.xlu0 %v688
      %v690 = vpop.xlane.xlu0 %689
      %v691 = vsel %vm438, %v394, 0.0
      %692 = vadd.xlane.f32.xlu0 %v691
      %v693 = vpop.xlane.xlu0 %692
      %v694 = vsel %vm438, %v395, 0.0
      %695 = vadd.xlane.f32.xlu0 %v694
      %v696 = vpop.xlane.xlu0 %695
      %v697 = vsel %vm438, %v396, 0.0
      %698 = vadd.xlane.f32.xlu0 %v697
      %v699 = vpop.xlane.xlu0 %698
      %v700 = vsel %vm438, %v397, 0.0
      %701 = vadd.xlane.f32.xlu0 %v700
      %v702 = vpop.xlane.xlu0 %701
      %v703 = vsel %vm438, %v398, 0.0
      %704 = vadd.xlane.f32.xlu0 %v703
      %v705 = vpop.xlane.xlu0 %704
      %v706 = vsel %vm438, %v399, 0.0
      %707 = vadd.xlane.f32.xlu0 %v706
      %v708 = vpop.xlane.xlu0 %707
      %v709 = vsel %vm438, %v400, 0.0
      %710 = vadd.xlane.f32.xlu0 %v709
      %v711 = vpop.xlane.xlu0 %710
      %v712 = vsel %vm438, %v401, 0.0
      %713 = vadd.xlane.f32.xlu0 %v712
      %v714 = vpop.xlane.xlu0 %713
      %v715 = vsel %vm438, %v402, 0.0
      %716 = vadd.xlane.f32.xlu0 %v715
      %v717 = vpop.xlane.xlu0 %716
      %v718 = vsel %vm438, %v403, 0.0
      %719 = vadd.xlane.f32.xlu0 %v718
      %v720 = vpop.xlane.xlu0 %719
      %v721 = vsel %vm438, %v404, 0.0
      %722 = vadd.xlane.f32.xlu0 %v721
      %v723 = vpop.xlane.xlu0 %722
      %v724 = vsel %vm438, %v405, 0.0
      %725 = vadd.xlane.f32.xlu0 %v724
      %v726 = vpop.xlane.xlu0 %725
      %v727 = vsel %vm438, %v406, 0.0
      %728 = vadd.xlane.f32.xlu0 %v727
      %v729 = vpop.xlane.xlu0 %728
      %v730 = vsel %vm438, %v407, 0.0
      %731 = vadd.xlane.f32.xlu0 %v730
      %v732 = vpop.xlane.xlu0 %731
      %v733 = vsel %vm438, %v408, 0.0
      %734 = vadd.xlane.f32.xlu0 %v733
      %v735 = vpop.xlane.xlu0 %734
      %v736 = vsel %vm438, %v409, 0.0
      %737 = vadd.xlane.f32.xlu0 %v736
      %v738 = vpop.xlane.xlu0 %737
      %v739 = vsel %vm438, %v410, 0.0
      %740 = vadd.xlane.f32.xlu0 %v739
      %v741 = vpop.xlane.xlu0 %740
      %v742 = vsel %vm438, %v411, 0.0
      %743 = vadd.xlane.f32.xlu0 %v742
      %v744 = vpop.xlane.xlu0 %743
      %v745 = vsel %vm438, %v412, 0.0
      %746 = vadd.xlane.f32.xlu0 %v745
      %v747 = vpop.xlane.xlu0 %746
      %v748 = vsel %vm438, %v413, 0.0
      %749 = vadd.xlane.f32.xlu0 %v748
      %v750 = vpop.xlane.xlu0 %749
      %v751 = vsel %vm438, %v414, 0.0
      %752 = vadd.xlane.f32.xlu0 %v751
      %v753 = vpop.xlane.xlu0 %752
      %v754 = vsel %vm438, %v415, 0.0
      %755 = vadd.xlane.f32.xlu0 %v754
      %v756 = vpop.xlane.xlu0 %755
      %v757 = vsel %vm438, %v416, 0.0
      %758 = vadd.xlane.f32.xlu0 %v757
      %v759 = vpop.xlane.xlu0 %758
      %v760 = vsel %vm438, %v417, 0.0
      %761 = vadd.xlane.f32.xlu0 %v760
      %v762 = vpop.xlane.xlu0 %761
      %v763 = vsel %vm438, %v418, 0.0
      %764 = vadd.xlane.f32.xlu0 %v763
      %v765 = vpop.xlane.xlu0 %764
      %v766 = vsel %vm438, %v419, 0.0
      %767 = vadd.xlane.f32.xlu0 %v766
      %v768 = vpop.xlane.xlu0 %767
      %v769 = vsel %vm438, %v420, 0.0
      %770 = vadd.xlane.f32.xlu0 %v769
      %v771 = vpop.xlane.xlu0 %770
      %v772 = vsel %vm438, %v421, 0.0
      %773 = vadd.xlane.f32.xlu0 %v772
      %v774 = vpop.xlane.xlu0 %773
      %v775 = vsel %vm438, %v422, 0.0
      %776 = vadd.xlane.f32.xlu0 %v775
      %v777 = vpop.xlane.xlu0 %776
      %v778 = vsel %vm438, %v423, 0.0
      %779 = vadd.xlane.f32.xlu0 %v778
      %v780 = vpop.xlane.xlu0 %779
      %v781 = vsel %vm438, %v424, 0.0
      %782 = vadd.xlane.f32.xlu0 %v781
      %v783 = vpop.xlane.xlu0 %782
      %v784 = vsel %vm438, %v425, 0.0
      %785 = vadd.xlane.f32.xlu0 %v784
      %v786 = vpop.xlane.xlu0 %785
      %v787 = vsel %vm438, %v426, 0.0
      %788 = vadd.xlane.f32.xlu0 %v787
      %v789 = vpop.xlane.xlu0 %788
      %v790 = vsel %vm438, %v427, 0.0
      %791 = vadd.xlane.f32.xlu0 %v790
      %v792 = vpop.xlane.xlu0 %791
      %v793 = vsel %vm438, %v428, 0.0
      %794 = vadd.xlane.f32.xlu0 %v793
      %v795 = vpop.xlane.xlu0 %794
      %v796 = vsel %vm438, %v429, 0.0
      %797 = vadd.xlane.f32.xlu0 %v796
      %v798 = vpop.xlane.xlu0 %797
      %v799 = vsel %vm438, %v430, 0.0
      %800 = vadd.xlane.f32.xlu0 %v799
      %v801 = vpop.xlane.xlu0 %800
      %v802 = vsel %vm438, %v431, 0.0
      %803 = vadd.xlane.f32.xlu0 %v802
      %v804 = vpop.xlane.xlu0 %803
      %v805 = vsel %vm438, %v432, 0.0
      %806 = vadd.xlane.f32.xlu0 %v805
      %v807 = vpop.xlane.xlu0 %806
      %v808 = vsel %vm438, %v433, 0.0
      %809 = vadd.xlane.f32.xlu0 %v808
      %v810 = vpop.xlane.xlu0 %809
      %v811 = vsel %vm438, %v434, 0.0
      %812 = vadd.xlane.f32.xlu0 %v811
      %v813 = vpop.xlane.xlu0 %812
      %v814 = vsel %vm438, %v435, 0.0
      %815 = vadd.xlane.f32.xlu0 %v814
      %v816 = vpop.xlane.xlu0 %815
      %v817 = vsel %vm438, %v436, 0.0
      %818 = vadd.xlane.f32.xlu0 %v817
      %v819 = vpop.xlane.xlu0 %818
      %v820 = vsel %vm438, %v437, 0.0
      %821 = vadd.xlane.f32.xlu0 %v820
      %v822 = vpop.xlane.xlu0 %821
      %s823 = sld [smem:[#allocation2]]
      %v824 = vstv %s823
      %v825 = vadd.f32 %v441, %v824
      %v826 = vadd.f32 %v444, %v824
      %v827 = vadd.f32 %v447, %v824
      %v828 = vadd.f32 %v450, %v824
      %v829 = vadd.f32 %v453, %v824
      %v830 = vadd.f32 %v456, %v824
      %v831 = vadd.f32 %v459, %v824
      %v832 = vadd.f32 %v462, %v824
      %v833 = vadd.f32 %v465, %v824
      %v834 = vadd.f32 %v468, %v824
      %v835 = vadd.f32 %v471, %v824
      %v836 = vadd.f32 %v474, %v824
      %v837 = vadd.f32 %v477, %v824
      %v838 = vadd.f32 %v480, %v824
      %v839 = vadd.f32 %v483, %v824
      %v840 = vadd.f32 %v486, %v824
      %v841 = vadd.f32 %v489, %v824
      %v842 = vadd.f32 %v492, %v824
      %v843 = vadd.f32 %v495, %v824
      %v844 = vadd.f32 %v498, %v824
      %v845 = vadd.f32 %v501, %v824
      %v846 = vadd.f32 %v504, %v824
      %v847 = vadd.f32 %v507, %v824
      %v848 = vadd.f32 %v510, %v824
      %v849 = vadd.f32 %v513, %v824
      %v850 = vadd.f32 %v516, %v824
      %v851 = vadd.f32 %v519, %v824
      %v852 = vadd.f32 %v522, %v824
      %v853 = vadd.f32 %v525, %v824
      %v854 = vadd.f32 %v528, %v824
      %v855 = vadd.f32 %v531, %v824
      %v856 = vadd.f32 %v534, %v824
      %v857 = vadd.f32 %v537, %v824
      %v858 = vadd.f32 %v540, %v824
      %v859 = vadd.f32 %v543, %v824
      %v860 = vadd.f32 %v546, %v824
      %v861 = vadd.f32 %v549, %v824
      %v862 = vadd.f32 %v552, %v824
      %v863 = vadd.f32 %v555, %v824
      %v864 = vadd.f32 %v558, %v824
      %v865 = vadd.f32 %v561, %v824
      %v866 = vadd.f32 %v564, %v824
      %v867 = vadd.f32 %v567, %v824
      %v868 = vadd.f32 %v570, %v824
      %v869 = vadd.f32 %v573, %v824
      %v870 = vadd.f32 %v576, %v824
      %v871 = vadd.f32 %v579, %v824
      %v872 = vadd.f32 %v582, %v824
      %v873 = vadd.f32 %v585, %v824
      %v874 = vadd.f32 %v588, %v824
      %v875 = vadd.f32 %v591, %v824
      %v876 = vadd.f32 %v594, %v824
      %v877 = vadd.f32 %v597, %v824
      %v878 = vadd.f32 %v600, %v824
      %v879 = vadd.f32 %v603, %v824
      %v880 = vadd.f32 %v606, %v824
      %v881 = vadd.f32 %v609, %v824
      %v882 = vadd.f32 %v612, %v824
      %v883 = vadd.f32 %v615, %v824
      %v884 = vadd.f32 %v618, %v824
      %v885 = vadd.f32 %v621, %v824
      %v886 = vadd.f32 %v624, %v824
      %v887 = vadd.f32 %v627, %v824
      %v888 = vadd.f32 %v630, %v824
      %v889 = vadd.f32 %v633, %v824
      %v890 = vadd.f32 %v636, %v824
      %v891 = vadd.f32 %v639, %v824
      %v892 = vadd.f32 %v642, %v824
      %v893 = vadd.f32 %v645, %v824
      %v894 = vadd.f32 %v648, %v824
      %v895 = vadd.f32 %v651, %v824
      %v896 = vadd.f32 %v654, %v824
      %v897 = vadd.f32 %v657, %v824
      %v898 = vadd.f32 %v660, %v824
      %v899 = vadd.f32 %v663, %v824
      %v900 = vadd.f32 %v666, %v824
      %v901 = vadd.f32 %v669, %v824
      %v902 = vadd.f32 %v672, %v824
      %v903 = vadd.f32 %v675, %v824
      %v904 = vadd.f32 %v678, %v824
      %v905 = vadd.f32 %v681, %v824
      %v906 = vadd.f32 %v684, %v824
      %v907 = vadd.f32 %v687, %v824
      %v908 = vadd.f32 %v690, %v824
      %v909 = vadd.f32 %v693, %v824
      %v910 = vadd.f32 %v696, %v824
      %v911 = vadd.f32 %v699, %v824
      %v912 = vadd.f32 %v702, %v824
      %v913 = vadd.f32 %v705, %v824
      %v914 = vadd.f32 %v708, %v824
      %v915 = vadd.f32 %v711, %v824
      %v916 = vadd.f32 %v714, %v824
      %v917 = vadd.f32 %v717, %v824
      %v918 = vadd.f32 %v720, %v824
      %v919 = vadd.f32 %v723, %v824
      %v920 = vadd.f32 %v726, %v824
      %v921 = vadd.f32 %v729, %v824
      %v922 = vadd.f32 %v732, %v824
      %v923 = vadd.f32 %v735, %v824
      %v924 = vadd.f32 %v738, %v824
      %v925 = vadd.f32 %v741, %v824
      %v926 = vadd.f32 %v744, %v824
      %v927 = vadd.f32 %v747, %v824
      %v928 = vadd.f32 %v750, %v824
      %v929 = vadd.f32 %v753, %v824
      %v930 = vadd.f32 %v756, %v824
      %v931 = vadd.f32 %v759, %v824
      %v932 = vadd.f32 %v762, %v824
      %v933 = vadd.f32 %v765, %v824
      %v934 = vadd.f32 %v768, %v824
      %v935 = vadd.f32 %v771, %v824
      %v936 = vadd.f32 %v774, %v824
      %v937 = vadd.f32 %v777, %v824
      %v938 = vadd.f32 %v780, %v824
      %v939 = vadd.f32 %v783, %v824
      %v940 = vadd.f32 %v786, %v824
      %v941 = vadd.f32 %v789, %v824
      %v942 = vadd.f32 %v792, %v824
      %v943 = vadd.f32 %v795, %v824
      %v944 = vadd.f32 %v798, %v824
      %v945 = vadd.f32 %v801, %v824
      %v946 = vadd.f32 %v804, %v824
      %v947 = vadd.f32 %v807, %v824
      %v948 = vadd.f32 %v810, %v824
      %v949 = vadd.f32 %v813, %v824
      %v950 = vadd.f32 %v816, %v824
      %v951 = vadd.f32 %v819, %v824
      %v952 = vadd.f32 %v822, %v824
      %vm953 = vcmask 7168
      %954 = vst.msk [vmem:[%s173] sm:$0xff] %vm953, %v825
      %955 = vst.msk [vmem:[%s173 + $0x8] sm:$0xff] %vm953, %v826
      %956 = vst.msk [vmem:[%s173 + $0x10] sm:$0xff] %vm953, %v827
      %957 = vst.msk [vmem:[%s173 + $0x18] sm:$0xff] %vm953, %v828
      %958 = vst.msk [vmem:[%s173 + $0x20] sm:$0xff] %vm953, %v829
      %959 = vst.msk [vmem:[%s173 + $0x28] sm:$0xff] %vm953, %v830
      %960 = vst.msk [vmem:[%s173 + $0x30] sm:$0xff] %vm953, %v831
      %961 = vst.msk [vmem:[%s173 + $0x38] sm:$0xff] %vm953, %v832
      %962 = vst.msk [vmem:[%s173 + $0x40] sm:$0xff] %vm953, %v833
      %963 = vst.msk [vmem:[%s173 + $0x48] sm:$0xff] %vm953, %v834
      %964 = vst.msk [vmem:[%s173 + $0x50] sm:$0xff] %vm953, %v835
      %965 = vst.msk [vmem:[%s173 + $0x58] sm:$0xff] %vm953, %v836
      %966 = vst.msk [vmem:[%s173 + $0x60] sm:$0xff] %vm953, %v837
      %967 = vst.msk [vmem:[%s173 + $0x68] sm:$0xff] %vm953, %v838
      %968 = vst.msk [vmem:[%s173 + $0x70] sm:$0xff] %vm953, %v839
      %969 = vst.msk [vmem:[%s173 + $0x78] sm:$0xff] %vm953, %v840
      %970 = vst.msk [vmem:[%s173 + $0x80] sm:$0xff] %vm953, %v841
      %971 = vst.msk [vmem:[%s173 + $0x88] sm:$0xff] %vm953, %v842
      %972 = vst.msk [vmem:[%s173 + $0x90] sm:$0xff] %vm953, %v843
      %973 = vst.msk [vmem:[%s173 + $0x98] sm:$0xff] %vm953, %v844
      %974 = vst.msk [vmem:[%s173 + $0xa0] sm:$0xff] %vm953, %v845
      %975 = vst.msk [vmem:[%s173 + $0xa8] sm:$0xff] %vm953, %v846
      %976 = vst.msk [vmem:[%s173 + $0xb0] sm:$0xff] %vm953, %v847
      %977 = vst.msk [vmem:[%s173 + $0xb8] sm:$0xff] %vm953, %v848
      %978 = vst.msk [vmem:[%s173 + $0xc0] sm:$0xff] %vm953, %v849
      %979 = vst.msk [vmem:[%s173 + $0xc8] sm:$0xff] %vm953, %v850
      %980 = vst.msk [vmem:[%s173 + $0xd0] sm:$0xff] %vm953, %v851
      %981 = vst.msk [vmem:[%s173 + $0xd8] sm:$0xff] %vm953, %v852
      %982 = vst.msk [vmem:[%s173 + $0xe0] sm:$0xff] %vm953, %v853
      %983 = vst.msk [vmem:[%s173 + $0xe8] sm:$0xff] %vm953, %v854
      %984 = vst.msk [vmem:[%s173 + $0xf0] sm:$0xff] %vm953, %v855
      %985 = vst.msk [vmem:[%s173 + $0xf8] sm:$0xff] %vm953, %v856
      %986 = vst.msk [vmem:[%s173 + $0x100] sm:$0xff] %vm953, %v857
      %987 = vst.msk [vmem:[%s173 + $0x108] sm:$0xff] %vm953, %v858
      %988 = vst.msk [vmem:[%s173 + $0x110] sm:$0xff] %vm953, %v859
      %989 = vst.msk [vmem:[%s173 + $0x118] sm:$0xff] %vm953, %v860
      %990 = vst.msk [vmem:[%s173 + $0x120] sm:$0xff] %vm953, %v861
      %991 = vst.msk [vmem:[%s173 + $0x128] sm:$0xff] %vm953, %v862
      %992 = vst.msk [vmem:[%s173 + $0x130] sm:$0xff] %vm953, %v863
      %993 = vst.msk [vmem:[%s173 + $0x138] sm:$0xff] %vm953, %v864
      %994 = vst.msk [vmem:[%s173 + $0x140] sm:$0xff] %vm953, %v865
      %995 = vst.msk [vmem:[%s173 + $0x148] sm:$0xff] %vm953, %v866
      %996 = vst.msk [vmem:[%s173 + $0x150] sm:$0xff] %vm953, %v867
      %997 = vst.msk [vmem:[%s173 + $0x158] sm:$0xff] %vm953, %v868
      %998 = vst.msk [vmem:[%s173 + $0x160] sm:$0xff] %vm953, %v869
      %999 = vst.msk [vmem:[%s173 + $0x168] sm:$0xff] %vm953, %v870
      %1000 = vst.msk [vmem:[%s173 + $0x170] sm:$0xff] %vm953, %v871
      %1001 = vst.msk [vmem:[%s173 + $0x178] sm:$0xff] %vm953, %v872
      %1002 = vst.msk [vmem:[%s173 + $0x180] sm:$0xff] %vm953, %v873
      %1003 = vst.msk [vmem:[%s173 + $0x188] sm:$0xff] %vm953, %v874
      %1004 = vst.msk [vmem:[%s173 + $0x190] sm:$0xff] %vm953, %v875
      %1005 = vst.msk [vmem:[%s173 + $0x198] sm:$0xff] %vm953, %v876
      %1006 = vst.msk [vmem:[%s173 + $0x1a0] sm:$0xff] %vm953, %v877
      %1007 = vst.msk [vmem:[%s173 + $0x1a8] sm:$0xff] %vm953, %v878
      %1008 = vst.msk [vmem:[%s173 + $0x1b0] sm:$0xff] %vm953, %v879
      %1009 = vst.msk [vmem:[%s173 + $0x1b8] sm:$0xff] %vm953, %v880
      %1010 = vst.msk [vmem:[%s173 + $0x1c0] sm:$0xff] %vm953, %v881
      %1011 = vst.msk [vmem:[%s173 + $0x1c8] sm:$0xff] %vm953, %v882
      %1012 = vst.msk [vmem:[%s173 + $0x1d0] sm:$0xff] %vm953, %v883
      %1013 = vst.msk [vmem:[%s173 + $0x1d8] sm:$0xff] %vm953, %v884
      %1014 = vst.msk [vmem:[%s173 + $0x1e0] sm:$0xff] %vm953, %v885
      %1015 = vst.msk [vmem:[%s173 + $0x1e8] sm:$0xff] %vm953, %v886
      %1016 = vst.msk [vmem:[%s173 + $0x1f0] sm:$0xff] %vm953, %v887
      %1017 = vst.msk [vmem:[%s173 + $0x1f8] sm:$0xff] %vm953, %v888
      %1018 = vst.msk [vmem:[%s173 + $0x200] sm:$0xff] %vm953, %v889
      %1019 = vst.msk [vmem:[%s173 + $0x208] sm:$0xff] %vm953, %v890
      %1020 = vst.msk [vmem:[%s173 + $0x210] sm:$0xff] %vm953, %v891
      %1021 = vst.msk [vmem:[%s173 + $0x218] sm:$0xff] %vm953, %v892
      %1022 = vst.msk [vmem:[%s173 + $0x220] sm:$0xff] %vm953, %v893
      %1023 = vst.msk [vmem:[%s173 + $0x228] sm:$0xff] %vm953, %v894
      %1024 = vst.msk [vmem:[%s173 + $0x230] sm:$0xff] %vm953, %v895
      %1025 = vst.msk [vmem:[%s173 + $0x238] sm:$0xff] %vm953, %v896
      %1026 = vst.msk [vmem:[%s173 + $0x240] sm:$0xff] %vm953, %v897
      %1027 = vst.msk [vmem:[%s173 + $0x248] sm:$0xff] %vm953, %v898
      %1028 = vst.msk [vmem:[%s173 + $0x250] sm:$0xff] %vm953, %v899
      %1029 = vst.msk [vmem:[%s173 + $0x258] sm:$0xff] %vm953, %v900
      %1030 = vst.msk [vmem:[%s173 + $0x260] sm:$0xff] %vm953, %v901
      %1031 = vst.msk [vmem:[%s173 + $0x268] sm:$0xff] %vm953, %v902
      %1032 = vst.msk [vmem:[%s173 + $0x270] sm:$0xff] %vm953, %v903
      %1033 = vst.msk [vmem:[%s173 + $0x278] sm:$0xff] %vm953, %v904
      %1034 = vst.msk [vmem:[%s173 + $0x280] sm:$0xff] %vm953, %v905
      %1035 = vst.msk [vmem:[%s173 + $0x288] sm:$0xff] %vm953, %v906
      %1036 = vst.msk [vmem:[%s173 + $0x290] sm:$0xff] %vm953, %v907
      %1037 = vst.msk [vmem:[%s173 + $0x298] sm:$0xff] %vm953, %v908
      %1038 = vst.msk [vmem:[%s173 + $0x2a0] sm:$0xff] %vm953, %v909
      %1039 = vst.msk [vmem:[%s173 + $0x2a8] sm:$0xff] %vm953, %v910
      %1040 = vst.msk [vmem:[%s173 + $0x2b0] sm:$0xff] %vm953, %v911
      %1041 = vst.msk [vmem:[%s173 + $0x2b8] sm:$0xff] %vm953, %v912
      %1042 = vst.msk [vmem:[%s173 + $0x2c0] sm:$0xff] %vm953, %v913
      %1043 = vst.msk [vmem:[%s173 + $0x2c8] sm:$0xff] %vm953, %v914
      %1044 = vst.msk [vmem:[%s173 + $0x2d0] sm:$0xff] %vm953, %v915
      %1045 = vst.msk [vmem:[%s173 + $0x2d8] sm:$0xff] %vm953, %v916
      %1046 = vst.msk [vmem:[%s173 + $0x2e0] sm:$0xff] %vm953, %v917
      %1047 = vst.msk [vmem:[%s173 + $0x2e8] sm:$0xff] %vm953, %v918
      %1048 = vst.msk [vmem:[%s173 + $0x2f0] sm:$0xff] %vm953, %v919
      %1049 = vst.msk [vmem:[%s173 + $0x2f8] sm:$0xff] %vm953, %v920
      %1050 = vst.msk [vmem:[%s173 + $0x300] sm:$0xff] %vm953, %v921
      %1051 = vst.msk [vmem:[%s173 + $0x308] sm:$0xff] %vm953, %v922
      %1052 = vst.msk [vmem:[%s173 + $0x310] sm:$0xff] %vm953, %v923
      %1053 = vst.msk [vmem:[%s173 + $0x318] sm:$0xff] %vm953, %v924
      %1054 = vst.msk [vmem:[%s173 + $0x320] sm:$0xff] %vm953, %v925
      %1055 = vst.msk [vmem:[%s173 + $0x328] sm:$0xff] %vm953, %v926
      %1056 = vst.msk [vmem:[%s173 + $0x330] sm:$0xff] %vm953, %v927
      %1057 = vst.msk [vmem:[%s173 + $0x338] sm:$0xff] %vm953, %v928
      %1058 = vst.msk [vmem:[%s173 + $0x340] sm:$0xff] %vm953, %v929
      %1059 = vst.msk [vmem:[%s173 + $0x348] sm:$0xff] %vm953, %v930
      %1060 = vst.msk [vmem:[%s173 + $0x350] sm:$0xff] %vm953, %v931
      %1061 = vst.msk [vmem:[%s173 + $0x358] sm:$0xff] %vm953, %v932
      %1062 = vst.msk [vmem:[%s173 + $0x360] sm:$0xff] %vm953, %v933
      %1063 = vst.msk [vmem:[%s173 + $0x368] sm:$0xff] %vm953, %v934
      %1064 = vst.msk [vmem:[%s173 + $0x370] sm:$0xff] %vm953, %v935
      %1065 = vst.msk [vmem:[%s173 + $0x378] sm:$0xff] %vm953, %v936
      %1066 = vst.msk [vmem:[%s173 + $0x380] sm:$0xff] %vm953, %v937
      %1067 = vst.msk [vmem:[%s173 + $0x388] sm:$0xff] %vm953, %v938
      %1068 = vst.msk [vmem:[%s173 + $0x390] sm:$0xff] %vm953, %v939
      %1069 = vst.msk [vmem:[%s173 + $0x398] sm:$0xff] %vm953, %v940
      %1070 = vst.msk [vmem:[%s173 + $0x3a0] sm:$0xff] %vm953, %v941
      %1071 = vst.msk [vmem:[%s173 + $0x3a8] sm:$0xff] %vm953, %v942
      %1072 = vst.msk [vmem:[%s173 + $0x3b0] sm:$0xff] %vm953, %v943
      %1073 = vst.msk [vmem:[%s173 + $0x3b8] sm:$0xff] %vm953, %v944
      %1074 = vst.msk [vmem:[%s173 + $0x3c0] sm:$0xff] %vm953, %v945
      %1075 = vst.msk [vmem:[%s173 + $0x3c8] sm:$0xff] %vm953, %v946
      %1076 = vst.msk [vmem:[%s173 + $0x3d0] sm:$0xff] %vm953, %v947
      %1077 = vst.msk [vmem:[%s173 + $0x3d8] sm:$0xff] %vm953, %v948
      %1078 = vst.msk [vmem:[%s173 + $0x3e0] sm:$0xff] %vm953, %v949
      %1079 = vst.msk [vmem:[%s173 + $0x3e8] sm:$0xff] %vm953, %v950
      %1080 = vst.msk [vmem:[%s173 + $0x3f0] sm:$0xff] %vm953, %v951
      %1081 = vst.msk [vmem:[%s173 + $0x3f8] sm:$0xff] %vm953, %v952
      %s1082 = smul.u32 128, %s15
      %p1083 = scmp.lt.s32.totalorder %s1082, 383
      %s1084 = scalar_select %p1083, %s1082, 383
      %s1085 = smul.addr %s1084, 8
      %s1086 = scalar_lea.vmem %s3, %s1085
      // Predicated region
      $region33: #{tpu_custom_call.1} parent=31 // pred_check
        %p1087 = pneg %p101
      $region34: #{tpu_custom_call.1} parent=31 // pred_check_branch
        %1089 = sbr.rel (%p1087) target = $region36
      $region35: #{tpu_custom_call.1} parent=31 // pred_region
        %s1090 = smul.u32 128, %s15
      $region36: #{tpu_custom_call.1} parent=31 // pred_fallthru
        _
    $region32: #{tpu_custom_call.1} parent=5 // pred_fallthru
      _
    %p1091 = scmp.le.s32.totalorder 2, %s10
    // Predicated region
    $region37: #{tpu_custom_call.1} parent=5 // pred_check
      %p1092 = pneg %p1091
    $region38: #{tpu_custom_call.1} parent=5 // pred_check_branch
      %1094 = sbr.rel (%p1092) target = $region40
    $region39: #{tpu_custom_call.1} parent=5 // pred_region
      %s1095 = ssub.s32 %s10, 2
      // Predicated region
      $region41: #{tpu_custom_call.1} parent=39 // pred_check
        %p1096 = pneg %p107
      $region42: #{tpu_custom_call.1} parent=39 // pred_check_branch
        %1098 = sbr.rel (%p1096) target = $region44
      $region43: #{tpu_custom_call.1} parent=39 // pred_region
        %s1099 = smul.u32 128, %s16
        %p1100 = scmp.lt.s32.totalorder %s1099, 383
        %s1101 = scalar_select %p1100, %s1099, 383
        %s1102 = smul.addr %s1101, 8
        %s1103 = scalar_lea.vmem %s3, %s1102
      $region44: #{tpu_custom_call.1} parent=39 // pred_fallthru
        _
    $region40: #{tpu_custom_call.1} parent=5 // pred_fallthru
      _
  $region6: #{tpu_custom_call.1} parent=0 // loop_footer
    %s14 = sadd.s32 1, %s10
  $region7: #{tpu_custom_call.1} parent=0 // loop_footer_branch
    %9 = sbr.rel target = $region3
  $region8: #{tpu_custom_call.1} parent=0 // loop_exit
    _

</llo_original>
